<compile_context>
chip_gen: v7x
topology: tpu7x:2x2x1
jax: 0.10.0
libtpu: 0.0.40
codegen_flags: <defaults>
</compile_context>

<pallas_src>
import jax
import jax.numpy as jnp
from jax import lax
from jax.experimental import pallas as pl
from jax.experimental.pallas import tpu as pltpu

LANES = 128
ACC_ROWS = 64                         # multiple of f32(8)/bf16(16)/int8(32) packing
TARGET_BLOCK_BYTES = 8 * 1024 * 1024  # per input per grid step


def _tensorcores_per_chip() -> int:
    """2 on v7x (2 TensorCores/chip), else 1. Defensive: default to 1 on any doubt."""
    try:
        kind = jax.devices()[0].device_kind.lower()
    except Exception:
        return 1
    return 2 if "v7" in kind else 1


def _vmem_limit_bytes(block_bytes_per_input: int) -> int:
    # 2 inputs x 2 pipeline buffers x block, plus accumulator/output slack.
    # Cap below v7x's 64 MiB physical per-TC VMEM (v5e/v6e have 128 MiB).
    return min(56 * 1024 * 1024, 4 * block_bytes_per_input + (4 << 20))


def _infnorm_small_kernel(a_ref, b_ref, o_ref):
    # Whole problem fits in one block: single full reduce.
    d = jnp.abs(a_ref[...] - b_ref[...])
    o_ref[...] = jnp.full(o_ref.shape, jnp.max(d), dtype=o_ref.dtype)


def _make_tiled_kernel(tr, rows_total, tiles_per_core, need_mask, multi_core):
    folds = tr // ACC_ROWS

    def fold_max(d):
        # Fold the (tr,128) block onto the (ACC_ROWS,128) accumulator shape:
        # pure elementwise vmax over vregs, several independent chains.
        return jnp.max(d.reshape(folds, ACC_ROWS, LANES), axis=0)

    def kernel(a_ref, b_ref, o_ref, acc_ref):
        if multi_core:
            c = pl.program_id(0)
            i = pl.program_id(1)
            tile = c * tiles_per_core + i   # UNCLAMPED index (phantom tile -> >= num_tiles)
        else:
            i = pl.program_id(0)
            tile = i

        @pl.when(i == 0)
        def _init():
            acc_ref[...] = jnp.zeros_like(acc_ref)

        d = jnp.abs(a_ref[...] - b_ref[...])

        if need_mask:
            start_row = tile * tr
            is_edge = start_row + tr > rows_total   # ragged last tile or phantom tile

            @pl.when(jnp.logical_not(is_edge))
            def _fast():
                acc_ref[...] = jnp.maximum(acc_ref[...], fold_max(d))

            @pl.when(is_edge)
            def _edge():
                # Zero rows past the true extent. |a-b| >= 0, so a masked 0 can
                # never change the max (NaN/garbage in padded rows cannot leak).
                row_idx = lax.broadcasted_iota(jnp.int32, d.shape, 0) + start_row
                dm = jnp.where(row_idx < rows_total, d, jnp.zeros_like(d))
                acc_ref[...] = jnp.maximum(acc_ref[...], fold_max(dm))
        else:
            acc_ref[...] = jnp.maximum(acc_ref[...], fold_max(d))

        @pl.when(i == tiles_per_core - 1)
        def _finalize():
            o_ref[...] = jnp.full(o_ref.shape, jnp.max(acc_ref[...]), dtype=o_ref.dtype)

    return kernel


def _inf_norm_2d(a2, b2, dtype):
    """Max of |a2 - b2| over a lane-aligned (rows, 128) layout."""
    rows = a2.shape[0]
    itemsize = jnp.dtype(dtype).itemsize
    tr = (TARGET_BLOCK_BYTES // (LANES * itemsize)) // ACC_ROWS * ACC_ROWS
    tr = max(tr, ACC_ROWS)

    if rows <= tr:
        # Small problem: single block, single step.
        block_bytes = rows * LANES * itemsize
        out = pl.pallas_call(
            _infnorm_small_kernel,
            out_shape=jax.ShapeDtypeStruct((1, 1), dtype),
            grid_spec=pltpu.PrefetchScalarGridSpec(
                num_scalar_prefetch=0,
                grid=(1,),
                in_specs=[
                    pl.BlockSpec((rows, LANES), lambda i: (0, 0)),
                    pl.BlockSpec((rows, LANES), lambda i: (0, 0)),
                ],
                out_specs=pl.BlockSpec((1, 1), lambda i: (0, 0)),
            ),
            compiler_params=pltpu.CompilerParams(
                dimension_semantics=("arbitrary",),
                vmem_limit_bytes=_vmem_limit_bytes(block_bytes),
            ),
        )(a2, b2)
        return out[0, 0]

    num_tiles = pl.cdiv(rows, tr)
    block_bytes = tr * LANES * itemsize
    num_tc = _tensorcores_per_chip()

    if num_tc >= 2:
        # v7x: shard the reduction across the 2 TensorCores (core-parallel axis).
        tiles_per_core = -(-num_tiles // 2)
        phantom = (2 * tiles_per_core) != num_tiles
        need_mask = phantom or (rows % tr != 0)

        def row_block_index(c, i):
            idx = c * tiles_per_core + i
            if phantom:
                # Clamp the phantom tile onto the last real tile so its DMA stays
                # in bounds; its contribution is fully masked in the kernel.
                return jnp.minimum(idx, num_tiles - 1)
            return idx

        in_spec = pl.BlockSpec((tr, LANES), lambda c, i: (row_block_index(c, i), 0))
        kernel = _make_tiled_kernel(tr, rows, tiles_per_core, need_mask, multi_core=True)
        core_parallel = getattr(pltpu, "CORE_PARALLEL", "parallel")

        out = pl.pallas_call(
            kernel,
            out_shape=jax.ShapeDtypeStruct((2, 1, 1), dtype),
            grid_spec=pltpu.PrefetchScalarGridSpec(
                num_scalar_prefetch=0,
                grid=(2, tiles_per_core),
                in_specs=[in_spec, in_spec],
                out_specs=pl.BlockSpec((1, 1, 1), lambda c, i: (c, 0, 0)),
                scratch_shapes=[pltpu.VMEM((ACC_ROWS, LANES), dtype)],
            ),
            compiler_params=pltpu.CompilerParams(
                dimension_semantics=(core_parallel, "arbitrary"),
                vmem_limit_bytes=_vmem_limit_bytes(block_bytes),
            ),
        )(a2, b2)
        return jnp.max(out)

    # v5e / v6e: single TensorCore -> plain 1-D reduction grid; no phantom tile.
    need_mask = rows % tr != 0
    kernel = _make_tiled_kernel(tr, rows, num_tiles, need_mask, multi_core=False)
    out = pl.pallas_call(
        kernel,
        out_shape=jax.ShapeDtypeStruct((1, 1), dtype),
        grid_spec=pltpu.PrefetchScalarGridSpec(
            num_scalar_prefetch=0,
            grid=(num_tiles,),
            in_specs=[
                pl.BlockSpec((tr, LANES), lambda i: (i, 0)),
                pl.BlockSpec((tr, LANES), lambda i: (i, 0)),
            ],
            out_specs=pl.BlockSpec((1, 1), lambda i: (0, 0)),
            scratch_shapes=[pltpu.VMEM((ACC_ROWS, LANES), dtype)],
        ),
        compiler_params=pltpu.CompilerParams(
            dimension_semantics=("arbitrary",),
            vmem_limit_bytes=_vmem_limit_bytes(block_bytes),
        ),
    )(a2, b2)
    return out[0, 0]


def inf_norm(input_a, input_b):
    """Pallas equivalent of torch.max(torch.abs(input_a - input_b))."""
    assert input_a.shape == input_b.shape, "shapes must match"
    dtype = jnp.result_type(input_a.dtype, input_b.dtype)
    a = jnp.asarray(input_a, dtype).reshape(-1)  # free bitcast for contiguous inputs
    b = jnp.asarray(input_b, dtype).reshape(-1)

    n = a.shape[0]
    assert n > 0, "inf_norm of an empty tensor (torch.max would error too)"

    n_main = (n // LANES) * LANES
    tail = n - n_main

    if n_main == 0:
        # Fewer than 128 elements: a Pallas launch isn't worth it.
        return jnp.max(jnp.abs(a - b))

    # TODO(synk): a[:n_main] is a no-op when n % 128 == 0 (the common case); for
    # unaligned n XLA may still materialize the prefix slice.
    a2 = a[:n_main].reshape(n_main // LANES, LANES)
    b2 = b[:n_main].reshape(n_main // LANES, LANES)

    result = _inf_norm_2d(a2, b2, dtype)

    if tail:
        # <128-element tail reduced as a trivial fused XLA op (no pad copy).
        tail_max = jnp.max(jnp.abs(a[n_main:] - b[n_main:]))
        result = jnp.maximum(result, tail_max)

    return result


if __name__ == "__main__":
    key = jax.random.PRNGKey(0)
    k1, k2, k3, k4, k5, k6 = jax.random.split(key, 6)

    # 1) Small NCHW field consistent with the heat-equation module.
    shape_small = (2, 4, 16, 16)
    a = jax.random.normal(k1, shape_small, dtype=jnp.float32)
    b = jax.random.normal(k2, shape_small, dtype=jnp.float32)
    r = jax.block_until_ready(inf_norm(a, b))
    expected = jnp.max(jnp.abs(a - b))
    assert jnp.allclose(r, expected), (r, expected)

    # 2) Larger field exercising the tiled path (2 reduction steps, ragged edge,
    #    pl.when-gated mask on the last block only).
    shape_big = (4, 4, 1030, 128)
    a = jax.random.normal(k3, shape_big, dtype=jnp.float32)
    b = jax.random.normal(k4, shape_big, dtype=jnp.float32)
    r = jax.block_until_ready(inf_norm(a, b))
    expected = jnp.max(jnp.abs(a - b))
    assert jnp.allclose(r, expected), (r, expected)

    # 3) Element count not a multiple of 128 (tail handled outside the kernel).
    shape_odd = (2, 4, 15, 15)
    a = jax.random.normal(k5, shape_odd, dtype=jnp.float32)
    b = jax.random.normal(k6, shape_odd, dtype=jnp.float32)
    r = jax.block_until_ready(inf_norm(a, b))
    expected = jnp.max(jnp.abs(a - b))
    assert jnp.allclose(r, expected), (r, expected)

    print("KERNEL_OK")
</pallas_src>

<mosaic_0001>
module attributes {stable_mosaic.version = 11 : i64} {
  func.func @_infnorm_small_kernel(%arg0: i32, %arg1: memref<16x128xf32, #tpu.memory_space<vmem>>, %arg2: memref<16x128xf32, #tpu.memory_space<vmem>>, %arg3: memref<1x1xf32, #tpu.memory_space<vmem>>) attributes {dimension_semantics = [#tpu.dimension_semantics<arbitrary>], iteration_bounds = array<i64: 1>, scalar_prefetch = 0 : i64, scratch_operands = 0 : i64, tpu.core_type = #tpu.core_type<tc>, window_params = [{pipeline_mode = #tpu.pipeline_mode<synchronous>, transform_indices = @transform_0, window_bounds = array<i64: 16, 128>}, {pipeline_mode = #tpu.pipeline_mode<synchronous>, transform_indices = @transform_1, window_bounds = array<i64: 16, 128>}, {pipeline_mode = #tpu.pipeline_mode<synchronous>, transform_indices = @transform_2, window_bounds = array<i64: 1, 1>}]} {
    %c0 = arith.constant 0 : index
    %c0_0 = arith.constant 0 : index
    %0 = vector.load %arg1[%c0, %c0_0] : memref<16x128xf32, #tpu.memory_space<vmem>>, vector<16x128xf32>
    %c0_1 = arith.constant 0 : index
    %c0_2 = arith.constant 0 : index
    %1 = vector.load %arg2[%c0_1, %c0_2] : memref<16x128xf32, #tpu.memory_space<vmem>>, vector<16x128xf32>
    %2 = arith.subf %0, %1 : vector<16x128xf32>
    %3 = math.absf %2 : vector<16x128xf32>
    %4 = vector.shape_cast %3 : vector<16x128xf32> to vector<1x16x128xf32>
    %cst = arith.constant dense<0xFF800000> : vector<1xf32>
    %5 = vector.multi_reduction <maximumf>, %4, %cst [1, 2] : vector<1x16x128xf32> to vector<1xf32>
    %6 = vector.shape_cast %5 : vector<1xf32> to vector<1x1x1xf32>
    %7 = vector.extract %6[0, 0, 0] : f32 from vector<1x1x1xf32>
    %8 = vector.broadcast %7 : f32 to vector<1x1xf32>
    %c0_3 = arith.constant 0 : index
    %c0_4 = arith.constant 0 : index
    %9 = vector.load %arg3[%c0_3, %c0_4] : memref<1x1xf32, #tpu.memory_space<vmem>>, vector<1x1xf32>
    tpu.vector_store %arg3[%c0_3, %c0_4], %8 {strides = array<i32>} : memref<1x1xf32, #tpu.memory_space<vmem>>, vector<1x1xf32>,
    return
  }
  func.func @transform_0(%arg0: i32) -> (i32, i32) {
    %c0_i32 = arith.constant 0 : i32
    %c0_i32_0 = arith.constant 0 : i32
    %c0_i32_1 = arith.constant 0 : i32
    return %c0_i32, %c0_i32_0 : i32, i32
  }
  func.func @transform_1(%arg0: i32) -> (i32, i32) {
    %c0_i32 = arith.constant 0 : i32
    %c0_i32_0 = arith.constant 0 : i32
    %c0_i32_1 = arith.constant 0 : i32
    return %c0_i32, %c0_i32_0 : i32, i32
  }
  func.func @transform_2(%arg0: i32) -> (i32, i32) {
    %c0_i32 = arith.constant 0 : i32
    %c0_i32_0 = arith.constant 0 : i32
    %c0_i32_1 = arith.constant 0 : i32
    return %c0_i32, %c0_i32_0 : i32, i32
  }
}

</mosaic_0001>

<llo_original>
// kernel: tpu_custom_call.1
$region0: #{tpu_custom_call.1}
  #allocation0 [shape = 'u32[]', space=smem, size = 0x4, offset = 0x4, fixed_abs, tag = 'smem constant byte address 0x4 - core index']
  #allocation1 [shape = 'u32[144,128]{1,0:T(1,128)}', space=vmem, size = 0x12000, scoped, tag = 'internal scratch']
  %s0 = inlined_call_operand.hbm [shape: f32[16,128], index: 0, kind: input, shape index: {}]
  %s1 = inlined_call_operand.hbm [shape: f32[16,128], index: 1, kind: input, shape index: {}]
  %s2 = inlined_call_operand.hbm [shape: f32[1,1], index: 2, kind: output, shape index: {}]
  %s3 = sld [smem:[#allocation0]]
  $region26: #{tpu_custom_call.1} parent=0
    _
  %s5 = ssub.s32 1, %s3
  %s6 = scalar_select 0, %s5, %s3
  $region1: #{tpu_custom_call.1} parent=0
    #allocation2 [shape = 'u8[8192]{0}', space=vmem, size = 0x2000, scoped, tag = 'input window, operand 0, single buffered']
    #allocation3 [shape = 's32[1]{0}', space=sflag, size = 0x4, scoped, tag = 'scoped memory for tpu_custom_call.1']
    #allocation4 [shape = 's32[1]{0}', space=sflag, size = 0x4, scoped, tag = 'scoped memory for tpu_custom_call.1']
    #allocation5 [shape = 'u8[8192]{0}', space=vmem, size = 0x2000, scoped, tag = 'input window, operand 1, single buffered']
    #allocation6 [shape = 's32[1]{0}', space=sflag, size = 0x4, scoped, tag = 'scoped memory for tpu_custom_call.1']
    #allocation7 [shape = 'u8[512]{0}', space=vmem, size = 0x400, scoped, tag = 'output window, operand 0, single buffered']
    %7 = vsyncpa [#allocation3], 0
    %8 = vsyncpa [#allocation6], 0
    %9 = vsyncpa [#allocation4], 0
    // Predicated region
    $region2: #{tpu_custom_call.1} parent=1 // pred_check
      _
    $region3: #{tpu_custom_call.1} parent=1 // pred_check_branch
      %11 = sbr.rel (0) target = $region5
    $region4: #{tpu_custom_call.1} parent=1 // pred_region
      %s13 = ssub.s32 256, 256
      %14 = vsyncadd [#allocation3], %s13
      %s15 = sshll.u32 [#allocation2], 4
      %s16 = int_to_ptr.vmem [resolvable:$true] %s15
      %21 = dma.hbm_to_vmem [thread:$0]  %s0, 256, %s16, [#allocation3], 128, 128, 8
    $region5: #{tpu_custom_call.1} parent=1 // pred_fallthru
      _
    // Predicated region
    $region6: #{tpu_custom_call.1} parent=1 // pred_check
      _
    $region7: #{tpu_custom_call.1} parent=1 // pred_check_branch
      %23 = sbr.rel (0) target = $region9
    $region8: #{tpu_custom_call.1} parent=1 // pred_region
      %s25 = ssub.s32 256, 256
      %26 = vsyncadd [#allocation6], %s25
      %s27 = sshll.u32 [#allocation5], 4
      %s28 = int_to_ptr.vmem [resolvable:$true] %s27
      %33 = dma.hbm_to_vmem [thread:$0]  %s1, 256, %s28, [#allocation6], 128, 128, 8
    $region9: #{tpu_custom_call.1} parent=1 // pred_fallthru
      _
    // Predicated region
    $region10: #{tpu_custom_call.1} parent=1 // pred_check
      _
    $region11: #{tpu_custom_call.1} parent=1 // pred_check_branch
      %35 = sbr.rel (0) target = $region13
    $region12: #{tpu_custom_call.1} parent=1 // pred_region
      %36 = dma.done [#allocation3], 256
    $region13: #{tpu_custom_call.1} parent=1 // pred_fallthru
      _
    // Predicated region
    $region14: #{tpu_custom_call.1} parent=1 // pred_check
      _
    $region15: #{tpu_custom_call.1} parent=1 // pred_check_branch
      %38 = sbr.rel (0) target = $region17
    $region16: #{tpu_custom_call.1} parent=1 // pred_region
      %39 = dma.done [#allocation6], 256
    $region17: #{tpu_custom_call.1} parent=1 // pred_fallthru
      _
    %v40 = vld [vmem:[#allocation2] sm:$0xff]
    %v41 = vld [vmem:[#allocation2 + $0x8] sm:$0xff]
    %v42 = vld [vmem:[#allocation5] sm:$0xff]
    %v43 = vld [vmem:[#allocation5 + $0x8] sm:$0xff]
    %v44 = vsub.f32 %v40, %v42
    %v45 = vsub.f32 %v41, %v43
    %v46 = vand.u32 2147483647, %v44
    %v47 = vand.u32 2147483647, %v45
    %v48 = vmax.f32 %v46, %v47
    %49 = vmax.xlane.f32.xlu0 %v48
    %v50 = vpop.xlane.xlu0 %49
    %v51 = vrot.slane %v50, 4
    %v52 = vmax.f32 %v50, %v51
    %v53 = vrot.slane %v52, 2
    %v54 = vmax.f32 %v52, %v53
    %v55 = vrot.slane %v54, 1
    %v56 = vmax.f32 %v54, %v55
    %s57 = vtos %v56
    %v58 = vstv %s57
    %vm59 = vcmask 0
    %60 = vst.msk [vmem:[#allocation7] sm:$0x1] %vm59, %v58
    // Predicated region
    $region18: #{tpu_custom_call.1} parent=1 // pred_check
      _
    $region19: #{tpu_custom_call.1} parent=1 // pred_check_branch
      %62 = sbr.rel (0) target = $region21
    $region20: #{tpu_custom_call.1} parent=1 // pred_region
      %s64 = ssub.s32 16, 16
      %65 = vsyncadd [#allocation4], %s64
      %s67 = sshll.u32 [#allocation7], 4
      %s68 = int_to_ptr.vmem [resolvable:$true] %s67
      %70 = dma.vmem_to_hbm [thread:$0]  %s68, 16, %s2, [#allocation4]
    $region21: #{tpu_custom_call.1} parent=1 // pred_fallthru
      _
    // Predicated region
    $region22: #{tpu_custom_call.1} parent=1 // pred_check
      _
    $region23: #{tpu_custom_call.1} parent=1 // pred_check_branch
      %72 = sbr.rel (0) target = $region25
    $region24: #{tpu_custom_call.1} parent=1 // pred_region
      %73 = dma.done [#allocation4], 16
    $region25: #{tpu_custom_call.1} parent=1 // pred_fallthru
      _
    %74 = vsyncpa [#allocation3], 1
    %75 = vsyncpa [#allocation6], 1
    %76 = vsyncpa [#allocation4], 1

</llo_original>
